<compile_context>
chip_gen: v5e
topology: v5e:2x2
jax: 0.10.0
libtpu: 0.0.40
codegen_flags: <defaults>
</compile_context>

<pallas_src>
import functools

import jax
import jax.numpy as jnp
import numpy as np
from jax.experimental import pallas as pl
from jax.experimental.pallas import tpu as pltpu

# Controller constants (defaults from DynamicVAE.__init__).
ALPHA = 0.95
K_P = 0.01
K_I = 0.005
BETA_MIN = 1.0
BETA_INIT = 150.0

_MAX_BLOCK_ROWS = 512   # 512*128*4B = 256 KiB per f32 block (x2 double buffer)


def _dynamic_vae_kernel(target_ref, state_ref, kl_ref,     # SMEM (1,), SMEM (4,), VMEM tile
                        out_ref,                            # VMEM (1, 4) packed outputs
                        acc_ref,                            # VMEM (1, 1) f32 accumulator
                        *, batch, block_rows):
    i = pl.program_id(0)

    @pl.when(i == 0)
    def _init():
        acc_ref[...] = jnp.zeros_like(acc_ref)

    # Hot path: partial reduction of this kl tile (accumulate in f32).
    x = kl_ref[...].astype(jnp.float32)
    if batch % block_rows != 0:
        # Mask rows of the (padded) final block that lie past the real batch.
        rows = jax.lax.broadcasted_iota(jnp.int32, x.shape, 0) + i * block_rows
        x = jnp.where(rows < batch, x, 0.0)
    acc_ref[...] = acc_ref[...] + jnp.sum(x)

    @pl.when(i == pl.num_programs(0) - 1)
    def _finalize():
        kl_loss = acc_ref[...]              # (1, 1) f32
        target = target_ref[0]
        y_t1 = state_ref[0]
        e_t1 = state_ref[1]
        beta1 = state_ref[2]

        # PI controller (step_fn(x) = x if x < 0 else 0  ==  min(x, 0)).
        y_t = ALPHA * kl_loss + (1.0 - ALPHA) * y_t1
        e_t = y_t - target
        d_p = K_P * (jnp.minimum(e_t, 0.0) - jnp.minimum(e_t1, 0.0))
        gate = jnp.where(beta1 < BETA_MIN, 0.0, 1.0)   # dI_t := 0 when beta1 < beta_min
        d_i = (K_I * gate) * e_t
        beta = jnp.maximum(d_p + d_i + beta1, BETA_MIN)
        loss = kl_loss * beta

        # Pack [y_t, e_t, beta, loss] into a single (1, 4) tile -> one store/DMA.
        lane = jax.lax.broadcasted_iota(jnp.int32, (1, 4), 1)
        out_ref[...] = jnp.where(
            lane == 0, y_t,
            jnp.where(lane == 1, e_t,
                      jnp.where(lane == 2, beta, loss)))


@jax.jit
def _dynamic_vae_call(target, state, kl):
    """target: scalar, state: f32[1, 4] ([y_t1, e_t1, beta1, last_loss]), kl: any float dtype."""
    if kl.ndim == 1:
        kl = kl.reshape((1, kl.shape[0]))
    elif kl.ndim > 2:
        kl = kl.reshape((kl.shape[0], -1))
    B, D = kl.shape
    block_rows = B if B <= _MAX_BLOCK_ROWS else _MAX_BLOCK_ROWS
    grid = (pl.cdiv(B, block_rows),)

    target_arr = jnp.reshape(jnp.asarray(target, dtype=jnp.float32), (1,))
    state_smem = jnp.reshape(state.astype(jnp.float32), (4,))

    kernel = functools.partial(_dynamic_vae_kernel, batch=B, block_rows=block_rows)
    smem_spec = pl.BlockSpec(memory_space=pltpu.MemorySpace.SMEM)

    new_state = pl.pallas_call(
        kernel,
        out_shape=jax.ShapeDtypeStruct((1, 4), jnp.float32),
        grid_spec=pltpu.PrefetchScalarGridSpec(
            num_scalar_prefetch=0,
            grid=grid,
            in_specs=[
                smem_spec,                                        # target
                smem_spec,                                        # packed controller state
                pl.BlockSpec((block_rows, D), lambda i: (i, 0)),  # kl tiles (pipelined)
            ],
            out_specs=pl.BlockSpec((1, 4), lambda i: (0, 0)),
            scratch_shapes=[pltpu.VMEM((1, 1), jnp.float32)],
        ),
        compiler_params=pltpu.CompilerParams(
            dimension_semantics=("arbitrary",)),
    )(target_arr, state_smem, kl)

    loss = new_state[0, 3]
    beta = new_state[0, 2]
    e_t = new_state[0, 1]
    return new_state, loss, beta, e_t


class DynamicVAEPallas:
    """Stateful wrapper mirroring DynamicVAE; all math runs in the Pallas kernel.

    The controller state (y_t1, e_t1, beta1) stays on device as a packed f32
    vector threaded from one step's kernel output to the next step's input —
    no host round trip per training step.
    """

    def __init__(self, K, total_steps, C=11, K_p=0.01, K_i=0.005,
                 beta_min=1.0, beta_init=150.0):
        assert (K_p, K_i, beta_min) == (K_P, K_I, BETA_MIN)  # baked into the kernel
        self.total_steps = total_steps
        self.C = C
        self.K = K
        self.step_value = C / (total_steps // K)
        # Packed device state: [y_t1, e_t1, beta1, last_loss].
        self.state = jnp.asarray([[0.0, 0.0, beta_init, 0.0]], jnp.float32)
        self.summary = {}

    def forward(self, data_batch, global_step, kl, z_mean, z_logvar, z_sampled):
        # data_batch / z_mean / z_logvar / z_sampled are unused by the original
        # forward (only `kl` and the controller state participate).
        target = self.step_value * (min(global_step, self.total_steps) // self.K)
        new_state, loss, beta, e_t = _dynamic_vae_call(float(target), self.state, kl)
        self.state = new_state                 # stays on device, feeds the next step
        self.summary["beta"] = beta            # lazy device scalars (no .item() sync)
        self.summary["e_t"] = e_t
        self.summary["target"] = target
        return loss                            # kl.sum() * beta, device scalar


def _reference_forward(kl_np, state, global_step, K, total_steps, C):
    """Pure NumPy reference of the PyTorch forward (for verification)."""
    step_value = C / (total_steps // K)
    target = step_value * (min(global_step, total_steps) // K)
    kl_loss = float(np.sum(np.asarray(kl_np, np.float64)))
    y_t1, e_t1, beta1 = state
    y_t = ALPHA * kl_loss + (1 - ALPHA) * y_t1
    e_t = y_t - target
    sf = lambda v: v if v < 0 else 0.0
    d_p = K_P * (sf(e_t) - sf(e_t1))
    d_i = 0.0 if beta1 < BETA_MIN else K_I * e_t
    beta = max(d_p + d_i + beta1, BETA_MIN)
    return kl_loss * beta, (y_t, e_t, beta)


if __name__ == "__main__":
    key = jax.random.PRNGKey(0)
    k1, k2, k3 = jax.random.split(key, 3)

    total_steps, K, C = 1000, 10, 11

    # ---- Test 1: small f32 kl, two chained steps (on-device state feedback).
    B, D = 8, 128
    z_mean = jax.random.normal(k1, (B, D), jnp.float32)
    z_logvar = 0.1 * jax.random.normal(k2, (B, D), jnp.float32)
    z_sampled = z_mean
    kl = 0.5 * (jnp.exp(z_logvar) + z_mean ** 2 - 1.0 - z_logvar) / B
    data_batch = jnp.zeros((B, 1, 16, 16), jnp.float32)

    reg = DynamicVAEPallas(K=K, total_steps=total_steps, C=C)
    kl_np = np.asarray(jax.device_get(kl), dtype=np.float64)

    ref_state = (0.0, 0.0, BETA_INIT)
    got_losses, ref_losses = [], []
    for step in (37, 38):
        got_losses.append(reg.forward(data_batch, step, kl, z_mean, z_logvar, z_sampled))
        ref_loss, ref_state = _reference_forward(kl_np, ref_state, step, K, total_steps, C)
        ref_losses.append(ref_loss)

    got_losses = [float(jax.block_until_ready(l)) for l in got_losses]   # test-only sync
    for got, want in zip(got_losses, ref_losses):
        assert np.allclose(got, want, rtol=1e-4, atol=1e-3), (got, want)

    y_ref, e_ref, beta_ref = ref_state
    final_state = np.asarray(jax.device_get(reg.state))[0]
    assert np.allclose(final_state[0], y_ref, rtol=1e-4, atol=1e-3), (final_state[0], y_ref)
    assert np.allclose(final_state[1], e_ref, rtol=1e-4, atol=1e-3), (final_state[1], e_ref)
    assert np.allclose(final_state[2], beta_ref, rtol=1e-4, atol=1e-3), (final_state[2], beta_ref)

    # ---- Test 2: bf16 kl with a batch that does not divide the 512-row tile
    # (exercises the tiled grid, the masked final block, and the in-kernel cast).
    B2, D2 = 520, 128
    kl2 = (0.01 * jnp.abs(jax.random.normal(k3, (B2, D2), jnp.float32))).astype(jnp.bfloat16)
    reg2 = DynamicVAEPallas(K=K, total_steps=total_steps, C=C)
    loss2 = reg2.forward(data_batch, 123, kl2, None, None, None)
    loss2 = float(jax.block_until_ready(loss2))
    kl2_np = np.asarray(jax.device_get(kl2.astype(jnp.float32)), dtype=np.float64)
    ref_loss2, _ = _reference_forward(kl2_np, (0.0, 0.0, BETA_INIT), 123, K, total_steps, C)
    assert np.allclose(loss2, ref_loss2, rtol=2e-3, atol=1e-2), (loss2, ref_loss2)

    # TODO(synk): optional fusion of kl = 0.5*(exp(logvar)+mean^2-1-logvar) into the
    # kernel (would avoid materializing kl to HBM upstream); not part of this module's
    # forward, which receives kl precomputed.
    print("KERNEL_OK")
</pallas_src>

<mosaic_0001>
module attributes {stable_mosaic.version = 11 : i64} {
  func.func @_dynamic_vae_kernel(%arg0: i32, %arg1: memref<1xf32, #tpu.memory_space<smem>>, %arg2: memref<4xf32, #tpu.memory_space<smem>>, %arg3: memref<8x128xf32, #tpu.memory_space<vmem>>, %arg4: memref<1x4xf32, #tpu.memory_space<vmem>>, %arg5: memref<1x1xf32, #tpu.memory_space<vmem>>) attributes {dimension_semantics = [#tpu.dimension_semantics<arbitrary>], iteration_bounds = array<i64: 1>, scalar_prefetch = 0 : i64, scratch_operands = 1 : i64, tpu.core_type = #tpu.core_type<tc>, window_params = [{transform_indices = @transform_0, window_bounds = array<i64: 1>}, {transform_indices = @transform_1, window_bounds = array<i64: 4>}, {transform_indices = @transform_2, window_bounds = array<i64: 8, 128>}, {pipeline_mode = #tpu.pipeline_mode<synchronous>, transform_indices = @transform_3, window_bounds = array<i64: 1, 4>}]} {
    %c0_i32 = arith.constant 0 : i32
    %0 = arith.cmpi eq, %arg0, %c0_i32 : i32
    %1 = arith.extui %0 : i1 to i32
    %c0_i32_0 = arith.constant 0 : i32
    %2 = arith.cmpi ne, %1, %c0_i32_0 : i32
    scf.if %2 {
      %cst_8 = arith.constant 0.000000e+00 : f32
      %15 = vector.broadcast %cst_8 : f32 to vector<1x1xf32>
      %c0_9 = arith.constant 0 : index
      %c0_10 = arith.constant 0 : index
      %16 = vector.load %arg5[%c0_9, %c0_10] : memref<1x1xf32, #tpu.memory_space<vmem>>, vector<1x1xf32>
      tpu.vector_store %arg5[%c0_9, %c0_10], %15 {strides = array<i32>} : memref<1x1xf32, #tpu.memory_space<vmem>>, vector<1x1xf32>,
    } else {
    }
    %c0 = arith.constant 0 : index
    %c0_1 = arith.constant 0 : index
    %3 = vector.load %arg3[%c0, %c0_1] : memref<8x128xf32, #tpu.memory_space<vmem>>, vector<8x128xf32>
    %c0_2 = arith.constant 0 : index
    %c0_3 = arith.constant 0 : index
    %4 = vector.load %arg5[%c0_2, %c0_3] : memref<1x1xf32, #tpu.memory_space<vmem>>, vector<1x1xf32>
    %5 = vector.shape_cast %3 : vector<8x128xf32> to vector<1x8x128xf32>
    %cst = arith.constant dense<0.000000e+00> : vector<1xf32>
    %6 = vector.multi_reduction <add>, %5, %cst [1, 2] : vector<1x8x128xf32> to vector<1xf32>
    %7 = vector.shape_cast %6 : vector<1xf32> to vector<1x1x1xf32>
    %8 = vector.extract %7[0, 0, 0] : f32 from vector<1x1x1xf32>
    %9 = vector.broadcast %8 : f32 to vector<1x1xf32>
    %10 = arith.addf %4, %9 : vector<1x1xf32>
    %c0_4 = arith.constant 0 : index
    %c0_5 = arith.constant 0 : index
    %11 = vector.load %arg5[%c0_4, %c0_5] : memref<1x1xf32, #tpu.memory_space<vmem>>, vector<1x1xf32>
    tpu.vector_store %arg5[%c0_4, %c0_5], %10 {strides = array<i32>} : memref<1x1xf32, #tpu.memory_space<vmem>>, vector<1x1xf32>,
    %c0_i32_6 = arith.constant 0 : i32
    %12 = arith.cmpi eq, %arg0, %c0_i32_6 : i32
    %13 = arith.extui %12 : i1 to i32
    %c0_i32_7 = arith.constant 0 : i32
    %14 = arith.cmpi ne, %13, %c0_i32_7 : i32
    scf.if %14 {
      %c0_8 = arith.constant 0 : index
      %c0_9 = arith.constant 0 : index
      %15 = vector.load %arg5[%c0_8, %c0_9] : memref<1x1xf32, #tpu.memory_space<vmem>>, vector<1x1xf32>
      %c0_10 = arith.constant 0 : index
      %16 = memref.load %arg1[%c0_10] : memref<1xf32, #tpu.memory_space<smem>>
      %c0_11 = arith.constant 0 : index
      %17 = memref.load %arg2[%c0_11] : memref<4xf32, #tpu.memory_space<smem>>
      %c1 = arith.constant 1 : index
      %18 = memref.load %arg2[%c1] : memref<4xf32, #tpu.memory_space<smem>>
      %c2 = arith.constant 2 : index
      %19 = memref.load %arg2[%c2] : memref<4xf32, #tpu.memory_space<smem>>
      %cst_12 = arith.constant 0.949999988 : f32
      %20 = vector.broadcast %cst_12 : f32 to vector<1x1xf32>
      %21 = arith.mulf %20, %15 : vector<1x1xf32>
      %cst_13 = arith.constant 5.000000e-02 : f32
      %22 = arith.mulf %cst_13, %17 : f32
      %23 = vector.broadcast %22 : f32 to vector<1x1xf32>
      %24 = arith.addf %21, %23 : vector<1x1xf32>
      %25 = vector.broadcast %16 : f32 to vector<1x1xf32>
      %26 = arith.subf %24, %25 : vector<1x1xf32>
      %cst_14 = arith.constant 0.000000e+00 : f32
      %27 = vector.broadcast %cst_14 : f32 to vector<1x1xf32>
      %28 = arith.minimumf %26, %27 : vector<1x1xf32>
      %cst_15 = arith.constant 0.000000e+00 : f32
      %29 = arith.minimumf %18, %cst_15 : f32
      %30 = vector.broadcast %29 : f32 to vector<1x1xf32>
      %31 = arith.subf %28, %30 : vector<1x1xf32>
      %cst_16 = arith.constant 0.00999999977 : f32
      %32 = vector.broadcast %cst_16 : f32 to vector<1x1xf32>
      %33 = arith.mulf %32, %31 : vector<1x1xf32>
      %cst_17 = arith.constant 1.000000e+00 : f32
      %34 = arith.cmpf olt, %19, %cst_17 : f32
      %cst_18 = arith.constant 0.000000e+00 : f32
      %cst_19 = arith.constant 1.000000e+00 : f32
      %35 = arith.select %34, %cst_18, %cst_19 : f32
      %cst_20 = arith.constant 5.000000e-03 : f32
      %36 = arith.mulf %cst_20, %35 : f32
      %37 = vector.broadcast %36 : f32 to vector<1x1xf32>
      %38 = arith.mulf %37, %26 : vector<1x1xf32>
      %39 = arith.addf %33, %38 : vector<1x1xf32>
      %40 = vector.broadcast %19 : f32 to vector<1x1xf32>
      %41 = arith.addf %39, %40 : vector<1x1xf32>
      %cst_21 = arith.constant 1.000000e+00 : f32
      %42 = vector.broadcast %cst_21 : f32 to vector<1x1xf32>
      %43 = arith.maximumf %41, %42 : vector<1x1xf32>
      %44 = arith.mulf %15, %43 : vector<1x1xf32>
      %45 = tpu.iota {dimensions = array<i32: 1>} : vector<1x4xi32>
      %c0_i32_22 = arith.constant 0 : i32
      %46 = vector.broadcast %c0_i32_22 : i32 to vector<1x4xi32>
      %47 = arith.cmpi eq, %45, %46 : vector<1x4xi32>
      %c1_i32 = arith.constant 1 : i32
      %48 = vector.broadcast %c1_i32 : i32 to vector<1x4xi32>
      %49 = arith.cmpi eq, %45, %48 : vector<1x4xi32>
      %c2_i32 = arith.constant 2 : i32
      %50 = vector.broadcast %c2_i32 : i32 to vector<1x4xi32>
      %51 = arith.cmpi eq, %45, %50 : vector<1x4xi32>
      %52 = vector.shape_cast %43 : vector<1x1xf32> to vector<1x1xf32>
      %53 = vector.broadcast %52 : vector<1x1xf32> to vector<1x4xf32>
      %54 = vector.shape_cast %44 : vector<1x1xf32> to vector<1x1xf32>
      %55 = vector.broadcast %54 : vector<1x1xf32> to vector<1x4xf32>
      %56 = arith.select %51, %53, %55 : vector<1x4xi1>, vector<1x4xf32>
      %57 = vector.shape_cast %26 : vector<1x1xf32> to vector<1x1xf32>
      %58 = vector.broadcast %57 : vector<1x1xf32> to vector<1x4xf32>
      %59 = arith.select %49, %58, %56 : vector<1x4xi1>, vector<1x4xf32>
      %60 = vector.shape_cast %24 : vector<1x1xf32> to vector<1x1xf32>
      %61 = vector.broadcast %60 : vector<1x1xf32> to vector<1x4xf32>
      %62 = arith.select %47, %61, %59 : vector<1x4xi1>, vector<1x4xf32>
      %c0_23 = arith.constant 0 : index
      %c0_24 = arith.constant 0 : index
      %63 = vector.load %arg4[%c0_23, %c0_24] : memref<1x4xf32, #tpu.memory_space<vmem>>, vector<1x4xf32>
      tpu.vector_store %arg4[%c0_23, %c0_24], %62 {strides = array<i32>} : memref<1x4xf32, #tpu.memory_space<vmem>>, vector<1x4xf32>,
    } else {
    }
    return
  }
  func.func @transform_0(%arg0: i32) -> i32 {
    %c0_i32 = arith.constant 0 : i32
    %c0_i32_0 = arith.constant 0 : i32
    return %c0_i32 : i32
  }
  func.func @transform_1(%arg0: i32) -> i32 {
    %c0_i32 = arith.constant 0 : i32
    %c0_i32_0 = arith.constant 0 : i32
    return %c0_i32 : i32
  }
  func.func @transform_2(%arg0: i32) -> (i32, i32) {
    %c0_i32 = arith.constant 0 : i32
    %c0_i32_0 = arith.constant 0 : i32
    return %arg0, %c0_i32 : i32, i32
  }
  func.func @transform_3(%arg0: i32) -> (i32, i32) {
    %c0_i32 = arith.constant 0 : i32
    %c0_i32_0 = arith.constant 0 : i32
    %c0_i32_1 = arith.constant 0 : i32
    return %c0_i32, %c0_i32_0 : i32, i32
  }
}

</mosaic_0001>

<llo_original>
// kernel: _dynamic_vae_call.1
$region0: #{_dynamic_vae_call.1}
  #allocation0 [shape = 'u32[]', space=smem, size = 0x4, offset = 0x4, fixed_abs, tag = 'smem constant byte address 0x4 - core index']
  #allocation1 [shape = 'u32[72,128]{1,0:T(1,128)}', space=vmem, size = 0x9000, scoped, tag = 'internal scratch']
  #allocation2 [shape = 'f32[1,1]{1,0:T(1,128)}', space=vmem, size = 0x200, scoped, tag = 'scratch operand']
  #allocation3 [shape = 'f32[1]{0:T(128)S(6)}', space=smem, size = 0x200, scoped, tag = 'scoped memory for _dynamic_vae_call.1']
  %s0 = inlined_call_operand.<no memory space> [shape: f32[1], index: 0, kind: input, shape index: {}]
  %s1 = inlined_call_operand.vmem [shape: f32[4], index: 1, kind: input, shape index: {}]
  %s2 = inlined_call_operand.hbm [shape: f32[8,128], index: 2, kind: input, shape index: {}]
  %s3 = inlined_call_operand.vmem [shape: f32[1,4], index: 3, kind: output, shape index: {}]
  %s4 = sld [smem:[#allocation0]]
  $region38: #{_dynamic_vae_call.1} parent=0
    _
  %s6 = ssub.s32 1, %s4
  %s7 = scalar_select 0, %s6, %s4
  %8 = sst [smem:[#allocation3]] %s0
  $region1: #{_dynamic_vae_call.1} parent=0
    #allocation4 [shape = 'u8[512]{0}', space=smem, size = 0x200, scoped, tag = 'input window, operand 1, single buffered']
    #allocation5 [shape = 's32[1]{0}', space=sflag, size = 0x4, scoped, tag = 'scoped memory for _dynamic_vae_call.1']
    #allocation6 [shape = 's32[1]{0}', space=sflag, size = 0x4, scoped, tag = 'scoped memory for _dynamic_vae_call.1']
    #allocation7 [shape = 'u8[4096]{0}', space=vmem, size = 0x1000, scoped, tag = 'input window, operand 2, single buffered']
    %9 = vsyncpa [#allocation6], 0
    %10 = vsyncpa [#allocation5], 0
    // Predicated region
    $region2: #{_dynamic_vae_call.1} parent=1 // pred_check
      _
    $region3: #{_dynamic_vae_call.1} parent=1 // pred_check_branch
      %12 = sbr.rel (0) target = $region5
    $region4: #{_dynamic_vae_call.1} parent=1 // pred_region
      _
    $region5: #{_dynamic_vae_call.1} parent=1 // pred_fallthru
      _
    // Predicated region
    $region6: #{_dynamic_vae_call.1} parent=1 // pred_check
      _
    $region7: #{_dynamic_vae_call.1} parent=1 // pred_check_branch
      %14 = sbr.rel (0) target = $region9
    $region8: #{_dynamic_vae_call.1} parent=1 // pred_region
      %16 = vsyncadd [#allocation6], 0
      %s18 = sshll.u32 %s1, 4
      %s19 = int_to_ptr.vmem [resolvable:$true] %s18
      %21 = dma.vmem_to_smem %s19, 16, [#allocation4], [#allocation6]
    $region9: #{_dynamic_vae_call.1} parent=1 // pred_fallthru
      _
    // Predicated region
    $region10: #{_dynamic_vae_call.1} parent=1 // pred_check
      _
    $region11: #{_dynamic_vae_call.1} parent=1 // pred_check_branch
      %23 = sbr.rel (0) target = $region13
    $region12: #{_dynamic_vae_call.1} parent=1 // pred_region
      %25 = vsyncadd [#allocation5], 0
      %s27 = sshll.u32 %s2, 4
      %s28 = int_to_ptr.hbm [resolvable:$true] %s27
      %s29 = sshll.u32 [#allocation7], 4
      %s30 = int_to_ptr.vmem [resolvable:$true] %s29
      %32 = dma.hbm_to_vmem [thread:$0]  %s28, 128, %s30, [#allocation5]
    $region13: #{_dynamic_vae_call.1} parent=1 // pred_fallthru
      _
    // Predicated region
    $region14: #{_dynamic_vae_call.1} parent=1 // pred_check
      _
    $region15: #{_dynamic_vae_call.1} parent=1 // pred_check_branch
      %34 = sbr.rel (0) target = $region17
    $region16: #{_dynamic_vae_call.1} parent=1 // pred_region
      %36 = dma.done [#allocation6], 16
    $region17: #{_dynamic_vae_call.1} parent=1 // pred_fallthru
      _
    // Predicated region
    $region18: #{_dynamic_vae_call.1} parent=1 // pred_check
      _
    $region19: #{_dynamic_vae_call.1} parent=1 // pred_check_branch
      %38 = sbr.rel (0) target = $region21
    $region20: #{_dynamic_vae_call.1} parent=1 // pred_region
      %40 = dma.done [#allocation5], 128
    $region21: #{_dynamic_vae_call.1} parent=1 // pred_fallthru
      _
    %41 = sfence
    %p42 = scmp.eq.s32.totalorder 0, 0
    // Predicated region
    $region22: #{_dynamic_vae_call.1} parent=1 // pred_check
      %p43 = pneg %p42
    $region23: #{_dynamic_vae_call.1} parent=1 // pred_check_branch
      %45 = sbr.rel (%p43) target = $region25
    $region24: #{_dynamic_vae_call.1} parent=1 // pred_region
      %vm46 = vcmask 0
      %47 = vst.msk [vmem:[#allocation2] sm:$0x1] %vm46, 0.0
    $region25: #{_dynamic_vae_call.1} parent=1 // pred_fallthru
      _
    %v48 = vld [vmem:[#allocation7] sm:$0xff]
    %v49 = vld [vmem:[#allocation2] sm:$0x1]
    %50 = vadd.xlane.f32.xlu0 %v48
    %v51 = vpop.xlane.xlu0 %50
    %v52 = vrot.slane %v51, 4
    %v53 = vadd.f32 %v51, %v52
    %v54 = vrot.slane %v53, 2
    %v55 = vadd.f32 %v53, %v54
    %v56 = vrot.slane %v55, 1
    %v57 = vadd.f32 %v55, %v56
    %s58 = vtos %v57
    %v59 = vstv %s58
    %v60 = vadd.f32 %v49, %v59
    %vm61 = vcmask 0
    %62 = vst.msk [vmem:[#allocation2] sm:$0x1] %vm61, %v60
    // Predicated region
    $region26: #{_dynamic_vae_call.1} parent=1 // pred_check
      %p63 = pneg %p42
    $region27: #{_dynamic_vae_call.1} parent=1 // pred_check_branch
      %65 = sbr.rel (%p63) target = $region29
    $region28: #{_dynamic_vae_call.1} parent=1 // pred_region
      %v66 = vld [vmem:[#allocation2] sm:$0x1]
      %s67 = sld [smem:[#allocation3]]
      %s68 = sld [smem:[#allocation4]]
      %s69 = sld [smem:[#allocation4 + $0x1]]
      %s70 = sld [smem:[#allocation4 + $0x2]]
      %v71 = vmul.f32 %v66, 0.95
      %s72 = smul.f32 %s68, 0.05
      %v73 = vstv %s72
      %v74 = vadd.f32 %v71, %v73
      %v75 = vstv %s67
      %v76 = vsub.f32 %v74, %v75
      %v77 = vmin.f32 %v76, 0.0
      %s78 = smin.f32 %s69, 0.0
      %v79 = vstv %s78
      %v80 = vsub.f32 %v77, %v79
      %v81 = vmul.f32 %v80, 0.01
      %p82 = scmp.lt.f32.partialorder %s70, 1.0
      %s83 = scalar_select %p82, 0.0, 1.0
      %s84 = smul.f32 %s83, 0.005
      %v85 = vstv %s84
      %v86 = vmul.f32 %v85, %v76
      %v87 = vadd.f32 %v81, %v86
      %v88 = vstv %s70
      %v89 = vadd.f32 %v87, %v88
      %v90 = vmax.f32 %v89, 1.0
      %v91 = vmul.f32 %v66, %v90
      %v92 = vlaneseq
      %v93 = vand.u32 %v92, 127
      %vm94 = vcmp.eq.s32.totalorder %v93, 0
      %vm95 = vcmp.eq.s32.totalorder %v93, 1
      %vm96 = vcmp.eq.s32.totalorder %v93, 2
      %98 = vset.pattern.permute.xlu0 0
      %99 = vperm.xlu0 %98, %v90
      %v100 = vpop.permute.xlu0 %99
      %v102 = vperm.slane %v100, 0
      %104 = vset.pattern.permute.xlu0 0
      %105 = vperm.xlu0 %104, %v91
      %v106 = vpop.permute.xlu0 %105
      %v108 = vperm.slane %v106, 0
      %v109 = vsel %vm96, %v102, %v108
      %111 = vset.pattern.permute.xlu0 0
      %112 = vperm.xlu0 %111, %v76
      %v113 = vpop.permute.xlu0 %112
      %v115 = vperm.slane %v113, 0
      %v116 = vsel %vm95, %v115, %v109
      %118 = vset.pattern.permute.xlu0 0
      %119 = vperm.xlu0 %118, %v74
      %v120 = vpop.permute.xlu0 %119
      %v122 = vperm.slane %v120, 0
      %v123 = vsel %vm94, %v122, %v116
      %vm124 = vcmask 24576
      %125 = vst.msk [vmem:[%s3] sm:$0x1] %vm124, %v123
    $region29: #{_dynamic_vae_call.1} parent=1 // pred_fallthru
      _
    // Predicated region
    $region30: #{_dynamic_vae_call.1} parent=1 // pred_check
      _
    $region31: #{_dynamic_vae_call.1} parent=1 // pred_check_branch
      %127 = sbr.rel (0) target = $region33
    $region32: #{_dynamic_vae_call.1} parent=1 // pred_region
      _
    $region33: #{_dynamic_vae_call.1} parent=1 // pred_fallthru
      _
    // Predicated region
    $region34: #{_dynamic_vae_call.1} parent=1 // pred_check
      _
    $region35: #{_dynamic_vae_call.1} parent=1 // pred_check_branch
      %129 = sbr.rel (0) target = $region37
    $region36: #{_dynamic_vae_call.1} parent=1 // pred_region
      _
    $region37: #{_dynamic_vae_call.1} parent=1 // pred_fallthru
      _
    %130 = vsyncpa [#allocation5], 1
    %131 = vsyncpa [#allocation6], 1

</llo_original>
